<compile_context>
chip_gen: v6e
topology: v6e:2x2x1
jax: 0.10.0
libtpu: 0.0.40
codegen_flags: <defaults>
</compile_context>

<pallas_src>
import jax
import jax.numpy as jnp
from jax.experimental import pallas as pl
from jax.experimental.pallas import tpu as pltpu


def vad_kernel(seed_ref, x_ref, w3_ref, b3_ref, w4_ref, b4_ref, out_ref):
    tb = x_ref.shape[0]

    # fc3 (256 -> 32): cast the x tile to bf16 *inside* the kernel (VPU op, no extra
    # HBM pass); MXU runs bf16 x bf16 with an f32 accumulator; bias + ReLU in f32.
    x_bf = x_ref[...].astype(jnp.bfloat16)
    h = jnp.dot(x_bf, w3_ref[...], preferred_element_type=jnp.float32)
    h = jnp.maximum(h + b3_ref[...], 0.0)                          # [tb, 32] f32

    # dropout(p=0.5, training=True): keep w.p. 0.5, scale kept values by 2.
    # One 32-bit hash per row (keyed on seed + global row index), one bit per column.
    # NOTE: the global row index wraps uint32 past ~4e9 rows -- harmless for mask
    # quality, indices just stop being globally unique.
    pid = pl.program_id(0)
    row = jax.lax.broadcasted_iota(jnp.int32, (tb, 1), 0)
    gid = (pid * tb + row).astype(jnp.uint32)                      # global row id
    hsh = gid * jnp.uint32(2654435761) \
        + seed_ref[0].astype(jnp.uint32) * jnp.uint32(374761393)
    hsh = hsh ^ (hsh >> jnp.uint32(16))
    hsh = hsh * jnp.uint32(2246822519)            # 0x85EBCA77
    hsh = hsh ^ (hsh >> jnp.uint32(13))
    hsh = hsh * jnp.uint32(3266489917)            # 0xC2B2AE3D
    hsh = hsh ^ (hsh >> jnp.uint32(16))                            # [tb, 1] mixed
    col = jax.lax.broadcasted_iota(jnp.uint32, (1, 32), 1)
    keep = ((hsh >> col) & jnp.uint32(1)) == jnp.uint32(1)         # [tb, 32], p=0.5
    h = jnp.where(keep, h * 2.0, 0.0)

    # fc4 (32 -> 2), then transpose the tiny result to a lane-dense (2, tb) block
    # (unmasked full-lane stores, no lane-padded output buffers).
    out = jnp.dot(h, w4_ref[...], preferred_element_type=jnp.float32) + b4_ref[...]
    out_ref[...] = out.T.astype(out_ref.dtype)


def vad_predict(x, params, seed, *, tile_b=8192):
    """x: [B, 256] float32 -> [B, 2] float32 (training-mode forward: dropout active)."""
    B = x.shape[0]
    x = x.astype(jnp.float32)   # no-op for f32 inputs; kernel casts to bf16 on-chip

    def round_up(a, m):
        return (a + m - 1) // m * m

    # Batch tile: full batch if it fits one tile (block == array dim, always legal);
    # otherwise an (8,128)-aligned tile and Pallas masks the ragged final block.
    if B <= tile_b:
        tb = B
    else:
        tb = round_up(min(tile_b, B), 128)
    grid = (pl.cdiv(B, tb),)

    w3 = params["w3"].astype(jnp.bfloat16)     # tiny, resident in VMEM
    b3 = params["b3"].astype(jnp.float32)
    w4 = params["w4"].astype(jnp.float32)
    b4 = params["b4"].astype(jnp.float32)
    seed_arr = jnp.asarray([seed], dtype=jnp.int32)

    grid_spec = pltpu.PrefetchScalarGridSpec(
        num_scalar_prefetch=1,                                     # seed -> SMEM
        grid=grid,
        in_specs=[
            pl.BlockSpec((tb, 256), lambda i, seed: (i, 0)),       # x: streamed per tile
            pl.BlockSpec((256, 32), lambda i, seed: (0, 0)),       # w3: resident
            pl.BlockSpec((1, 32), lambda i, seed: (0, 0)),         # b3: resident
            pl.BlockSpec((32, 2), lambda i, seed: (0, 0)),         # w4: resident
            pl.BlockSpec((1, 2), lambda i, seed: (0, 0)),          # b4: resident
        ],
        out_specs=pl.BlockSpec((2, tb), lambda i, seed: (0, i)),   # lane-dense output
    )

    # v7x: real 2-TensorCore sharding needs CORE_PARALLEL ("parallel" is
    # codegen-neutral); fall back to "parallel" on single-TC chips (v5e/v6e).
    kind = getattr(jax.devices()[0], "device_kind", "").lower()
    core_parallel = getattr(pltpu, "CORE_PARALLEL", None)
    batch_sem = core_parallel if (core_parallel is not None and "v7" in kind) else "parallel"

    # Scoped-VMEM budget: the f32 x double-buffer dominates (2*tb*256*4 B); give 2x
    # headroom for scratch/temps but stay well under v7x's 64 MiB physical VMEM.
    vmem_need = 2 * tb * 256 * 4 + 2 * 2 * tb * 4 + (256 << 10)
    vmem_limit = int(min(max(2 * vmem_need, 16 << 20), 56 << 20))

    cost = pl.CostEstimate(
        flops=2 * B * 256 * 32 + 2 * B * 32 * 2,
        transcendentals=0,
        bytes_accessed=B * 256 * 4 + B * 2 * 4 + int(w3.size) * 2
                       + int(b3.size + w4.size + b4.size) * 4,
    )

    out = pl.pallas_call(
        vad_kernel,
        out_shape=jax.ShapeDtypeStruct((2, B), jnp.float32),
        grid_spec=grid_spec,
        compiler_params=pltpu.CompilerParams(
            dimension_semantics=(batch_sem,),
            vmem_limit_bytes=vmem_limit,
        ),
        cost_estimate=cost,
    )(seed_arr, x, w3, b3, w4, b4)
    return out.T                                                    # [B, 2]


def init_params(key):
    """Deterministic synthetic parameters with the shapes implied by __init__."""
    ks = jax.random.split(key, 8)

    def linear(kw, kb, fan_in, fan_out):
        # PyTorch Linear stores W as [out, in]; we keep [in, out] so y = x @ W + b.
        w = jax.random.normal(kw, (fan_in, fan_out), jnp.float32) * 0.02
        b = jax.random.normal(kb, (1, fan_out), jnp.float32) * 0.02
        return w, b

    w1, b1 = linear(ks[0], ks[1], 256, 256)   # fc1 (dead code in forward)
    w2, b2 = linear(ks[2], ks[3], 256, 256)   # fc2 (dead code in forward)
    w3, b3 = linear(ks[4], ks[5], 256, 32)    # fc3
    w4, b4 = linear(ks[6], ks[7], 32, 2)      # fc4
    return {"w1": w1, "b1": b1, "w2": w2, "b2": b2,
            "w3": w3, "b3": b3, "w4": w4, "b4": b4}


if __name__ == "__main__":
    key = jax.random.PRNGKey(0)
    k_param, k_x = jax.random.split(key)

    params = init_params(k_param)
    B = 8
    x = jax.random.normal(k_x, (B, 256), jnp.float32)

    out = vad_predict(x, params, seed=0)
    out = jax.block_until_ready(out)

    assert out.shape == (B, 2) and out.dtype == jnp.float32
    assert bool(jnp.all(jnp.isfinite(out)))
    print("KERNEL_OK")
</pallas_src>

<mosaic_0001>
module attributes {stable_mosaic.version = 11 : i64} {
  func.func @vad_kernel(%arg0: i32, %arg1: memref<1xi32, #tpu.memory_space<smem>>, %arg2: memref<8x256xf32, #tpu.memory_space<vmem>>, %arg3: memref<256x32xbf16, #tpu.memory_space<vmem>>, %arg4: memref<1x32xf32, #tpu.memory_space<vmem>>, %arg5: memref<32x2xf32, #tpu.memory_space<vmem>>, %arg6: memref<1x2xf32, #tpu.memory_space<vmem>>, %arg7: memref<2x8xf32, #tpu.memory_space<vmem>>) attributes {dimension_semantics = [#tpu.dimension_semantics<parallel>], iteration_bounds = array<i64: 1>, scalar_prefetch = 1 : i64, scratch_operands = 0 : i64, tpu.core_type = #tpu.core_type<tc>, window_params = [{transform_indices = @transform_0, window_bounds = array<i64: 8, 256>}, {pipeline_mode = #tpu.pipeline_mode<synchronous>, transform_indices = @transform_1, window_bounds = array<i64: 256, 32>}, {pipeline_mode = #tpu.pipeline_mode<synchronous>, transform_indices = @transform_2, window_bounds = array<i64: 1, 32>}, {pipeline_mode = #tpu.pipeline_mode<synchronous>, transform_indices = @transform_3, window_bounds = array<i64: 32, 2>}, {pipeline_mode = #tpu.pipeline_mode<synchronous>, transform_indices = @transform_4, window_bounds = array<i64: 1, 2>}, {transform_indices = @transform_5, window_bounds = array<i64: 2, 8>}]} {
    %c0 = arith.constant 0 : index
    %c0_0 = arith.constant 0 : index
    %0 = vector.load %arg2[%c0, %c0_0] : memref<8x256xf32, #tpu.memory_space<vmem>>, vector<8x256xf32>
    %1 = arith.truncf %0 : vector<8x256xf32> to vector<8x256xbf16>
    %c0_1 = arith.constant 0 : index
    %c0_2 = arith.constant 0 : index
    %2 = vector.load %arg3[%c0_1, %c0_2] : memref<256x32xbf16, #tpu.memory_space<vmem>>, vector<256x32xbf16>
    %cst = arith.constant dense<0.000000e+00> : vector<8x32xf32>
    %3 = tpu.matmul %1, %2, %cst {dimension_numbers = #tpu.dot_dimension_numbers<[1], [0], [0], [1], [0, 0, 1, 1], [], []>} : vector<8x256xbf16>, vector<256x32xbf16>, vector<8x32xf32> -> vector<8x32xf32>
    %c0_3 = arith.constant 0 : index
    %c0_4 = arith.constant 0 : index
    %4 = vector.load %arg4[%c0_3, %c0_4] : memref<1x32xf32, #tpu.memory_space<vmem>>, vector<1x32xf32>
    %5 = vector.broadcast %4 : vector<1x32xf32> to vector<8x32xf32>
    %6 = arith.addf %3, %5 : vector<8x32xf32>
    %cst_5 = arith.constant 0.000000e+00 : f32
    %7 = vector.broadcast %cst_5 : f32 to vector<8x32xf32>
    %8 = arith.maximumf %6, %7 : vector<8x32xf32>
    %9 = tpu.iota {dimensions = array<i32: 0>} : vector<8x1xi32>
    %c8_i32 = arith.constant 8 : i32
    %10 = arith.muli %arg0, %c8_i32 : i32
    %11 = vector.broadcast %10 : i32 to vector<8x1xi32>
    %12 = arith.addi %11, %9 : vector<8x1xi32>
    %c-1640531535_i32 = arith.constant -1640531535 : i32
    %13 = vector.broadcast %c-1640531535_i32 : i32 to vector<8x1xi32>
    %14 = arith.muli %12, %13 : vector<8x1xi32>
    %c0_6 = arith.constant 0 : index
    %15 = memref.load %arg1[%c0_6] : memref<1xi32, #tpu.memory_space<smem>>
    %c374761393_i32 = arith.constant 374761393 : i32
    %16 = arith.muli %15, %c374761393_i32 : i32
    %17 = vector.broadcast %16 : i32 to vector<8x1xi32>
    %18 = arith.addi %14, %17 : vector<8x1xi32>
    %c16_i32 = arith.constant 16 : i32
    %19 = vector.broadcast %c16_i32 : i32 to vector<8x1xi32>
    %20 = arith.shrui %18, %19 : vector<8x1xi32>
    %21 = arith.xori %18, %20 : vector<8x1xi32>
    %c-2048144777_i32 = arith.constant -2048144777 : i32
    %22 = vector.broadcast %c-2048144777_i32 : i32 to vector<8x1xi32>
    %23 = arith.muli %21, %22 : vector<8x1xi32>
    %c13_i32 = arith.constant 13 : i32
    %24 = vector.broadcast %c13_i32 : i32 to vector<8x1xi32>
    %25 = arith.shrui %23, %24 : vector<8x1xi32>
    %26 = arith.xori %23, %25 : vector<8x1xi32>
    %c-1028477379_i32 = arith.constant -1028477379 : i32
    %27 = vector.broadcast %c-1028477379_i32 : i32 to vector<8x1xi32>
    %28 = arith.muli %26, %27 : vector<8x1xi32>
    %c16_i32_7 = arith.constant 16 : i32
    %29 = vector.broadcast %c16_i32_7 : i32 to vector<8x1xi32>
    %30 = arith.shrui %28, %29 : vector<8x1xi32>
    %31 = arith.xori %28, %30 : vector<8x1xi32>
    %32 = tpu.iota {dimensions = array<i32: 1>} : vector<1x32xi32>
    %33 = vector.broadcast %31 : vector<8x1xi32> to vector<8x32xi32>
    %34 = vector.broadcast %32 : vector<1x32xi32> to vector<8x32xi32>
    %35 = arith.shrui %33, %34 : vector<8x32xi32>
    %c1_i32 = arith.constant 1 : i32
    %36 = vector.broadcast %c1_i32 : i32 to vector<8x32xi32>
    %37 = arith.andi %35, %36 : vector<8x32xi32>
    %c1_i32_8 = arith.constant 1 : i32
    %38 = vector.broadcast %c1_i32_8 : i32 to vector<8x32xi32>
    %39 = arith.cmpi eq, %37, %38 : vector<8x32xi32>
    %cst_9 = arith.constant 2.000000e+00 : f32
    %40 = vector.broadcast %cst_9 : f32 to vector<8x32xf32>
    %41 = arith.mulf %8, %40 : vector<8x32xf32>
    %cst_10 = arith.constant 0.000000e+00 : f32
    %42 = vector.broadcast %cst_10 : f32 to vector<8x32xf32>
    %43 = arith.select %39, %41, %42 : vector<8x32xi1>, vector<8x32xf32>
    %c0_11 = arith.constant 0 : index
    %c0_12 = arith.constant 0 : index
    %44 = vector.load %arg5[%c0_11, %c0_12] : memref<32x2xf32, #tpu.memory_space<vmem>>, vector<32x2xf32>
    %cst_13 = arith.constant dense<0.000000e+00> : vector<8x2xf32>
    %45 = tpu.matmul %43, %44, %cst_13 {dimension_numbers = #tpu.dot_dimension_numbers<[1], [0], [0], [1], [0, 0, 1, 1], [], []>} : vector<8x32xf32>, vector<32x2xf32>, vector<8x2xf32> -> vector<8x2xf32>
    %c0_14 = arith.constant 0 : index
    %c0_15 = arith.constant 0 : index
    %46 = vector.load %arg6[%c0_14, %c0_15] : memref<1x2xf32, #tpu.memory_space<vmem>>, vector<1x2xf32>
    %47 = vector.broadcast %46 : vector<1x2xf32> to vector<8x2xf32>
    %48 = arith.addf %45, %47 : vector<8x2xf32>
    %49 = tpu.transpose %48, [1, 0] : vector<8x2xf32> -> vector<2x8xf32>
    %c0_16 = arith.constant 0 : index
    %c0_17 = arith.constant 0 : index
    %50 = vector.load %arg7[%c0_16, %c0_17] : memref<2x8xf32, #tpu.memory_space<vmem>>, vector<2x8xf32>
    tpu.vector_store %arg7[%c0_16, %c0_17], %49 {strides = array<i32>} : memref<2x8xf32, #tpu.memory_space<vmem>>, vector<2x8xf32>,
    return
  }
  func.func @transform_0(%arg0: i32, %arg1: memref<1xi32, #tpu.memory_space<smem>>) -> (i32, i32) {
    %c0_i32 = arith.constant 0 : i32
    %c0_i32_0 = arith.constant 0 : i32
    return %arg0, %c0_i32 : i32, i32
  }
  func.func @transform_1(%arg0: i32, %arg1: memref<1xi32, #tpu.memory_space<smem>>) -> (i32, i32) {
    %c0_i32 = arith.constant 0 : i32
    %c0_i32_0 = arith.constant 0 : i32
    %c0_i32_1 = arith.constant 0 : i32
    return %c0_i32, %c0_i32_0 : i32, i32
  }
  func.func @transform_2(%arg0: i32, %arg1: memref<1xi32, #tpu.memory_space<smem>>) -> (i32, i32) {
    %c0_i32 = arith.constant 0 : i32
    %c0_i32_0 = arith.constant 0 : i32
    %c0_i32_1 = arith.constant 0 : i32
    return %c0_i32, %c0_i32_0 : i32, i32
  }
  func.func @transform_3(%arg0: i32, %arg1: memref<1xi32, #tpu.memory_space<smem>>) -> (i32, i32) {
    %c0_i32 = arith.constant 0 : i32
    %c0_i32_0 = arith.constant 0 : i32
    %c0_i32_1 = arith.constant 0 : i32
    return %c0_i32, %c0_i32_0 : i32, i32
  }
  func.func @transform_4(%arg0: i32, %arg1: memref<1xi32, #tpu.memory_space<smem>>) -> (i32, i32) {
    %c0_i32 = arith.constant 0 : i32
    %c0_i32_0 = arith.constant 0 : i32
    %c0_i32_1 = arith.constant 0 : i32
    return %c0_i32, %c0_i32_0 : i32, i32
  }
  func.func @transform_5(%arg0: i32, %arg1: memref<1xi32, #tpu.memory_space<smem>>) -> (i32, i32) {
    %c0_i32 = arith.constant 0 : i32
    %c0_i32_0 = arith.constant 0 : i32
    return %c0_i32, %arg0 : i32, i32
  }
}

</mosaic_0001>

<llo_original>
// kernel: tpu_custom_call.1
$region0: #{tpu_custom_call.1}
  #allocation0 [shape = 'u32[]', space=smem, size = 0x4, offset = 0x4, fixed_abs, tag = 'smem constant byte address 0x4 - core index']
  #allocation1 [shape = 'u32[144,128]{1,0:T(1,128)}', space=vmem, size = 0x12000, scoped, tag = 'internal scratch']
  #allocation2 [shape = 's32[1]{0}', space=sflag, size = 0x4, scoped, tag = 'scoped memory for tpu_custom_call.1']
  #allocation3 [shape = 's32[1]{0:T(128)S(6)}', space=smem, size = 0x200, scoped, tag = 'prefetched SMEM operand 0']
  %s0 = inlined_call_operand.<no memory space> [shape: s32[1], index: 0, kind: input, shape index: {}]
  %s1 = inlined_call_operand.vmem [shape: f32[8,256], index: 1, kind: input, shape index: {}]
  %s2 = inlined_call_operand.vmem [shape: bf16[256,32], index: 2, kind: input, shape index: {}]
  %s3 = inlined_call_operand.vmem [shape: f32[1,32], index: 3, kind: input, shape index: {}]
  %s4 = inlined_call_operand.vmem [shape: f32[32,2], index: 4, kind: input, shape index: {}]
  %s5 = inlined_call_operand.vmem [shape: f32[1,2], index: 5, kind: input, shape index: {}]
  %s6 = inlined_call_operand.hbm [shape: f32[2,8], index: 6, kind: output, shape index: {}]
  %s7 = sld [smem:[#allocation0]]
  $region30: #{tpu_custom_call.1} parent=0
    _
  %s9 = ssub.s32 1, %s7
  %s10 = scalar_select 0, %s9, %s7
  %11 = sst [smem:[#allocation3]] %s0
  $region1: #{tpu_custom_call.1} parent=0
    #allocation4 [shape = 'u8[1024]{0}', space=vmem, size = 0x400, scoped, tag = 'output window, operand 0, single buffered']
    #allocation5 [shape = 's32[1]{0}', space=sflag, size = 0x4, scoped, tag = 'scoped memory for tpu_custom_call.1']
    %12 = vsyncpa [#allocation5], 0
    // Predicated region
    $region2: #{tpu_custom_call.1} parent=1 // pred_check
      _
    $region3: #{tpu_custom_call.1} parent=1 // pred_check_branch
      %14 = sbr.rel (0) target = $region5
    $region4: #{tpu_custom_call.1} parent=1 // pred_region
      _
    $region5: #{tpu_custom_call.1} parent=1 // pred_fallthru
      _
    // Predicated region
    $region6: #{tpu_custom_call.1} parent=1 // pred_check
      _
    $region7: #{tpu_custom_call.1} parent=1 // pred_check_branch
      %16 = sbr.rel (0) target = $region9
    $region8: #{tpu_custom_call.1} parent=1 // pred_region
      _
    $region9: #{tpu_custom_call.1} parent=1 // pred_fallthru
      _
    // Predicated region
    $region10: #{tpu_custom_call.1} parent=1 // pred_check
      _
    $region11: #{tpu_custom_call.1} parent=1 // pred_check_branch
      %18 = sbr.rel (0) target = $region13
    $region12: #{tpu_custom_call.1} parent=1 // pred_region
      _
    $region13: #{tpu_custom_call.1} parent=1 // pred_fallthru
      _
    // Predicated region
    $region14: #{tpu_custom_call.1} parent=1 // pred_check
      _
    $region15: #{tpu_custom_call.1} parent=1 // pred_check_branch
      %20 = sbr.rel (0) target = $region17
    $region16: #{tpu_custom_call.1} parent=1 // pred_region
      _
    $region17: #{tpu_custom_call.1} parent=1 // pred_fallthru
      _
    // Predicated region
    $region18: #{tpu_custom_call.1} parent=1 // pred_check
      _
    $region19: #{tpu_custom_call.1} parent=1 // pred_check_branch
      %22 = sbr.rel (0) target = $region21
    $region20: #{tpu_custom_call.1} parent=1 // pred_region
      _
    $region21: #{tpu_custom_call.1} parent=1 // pred_fallthru
      _
    %v24 = vld [vmem:[%s1] sm:$0xff]
    %v25 = vld [vmem:[%s1 + $0x8] sm:$0xff]
    %v26 = vpack.c.bf16 %v24, %v24
    %v27 = vpack.c.bf16 %v25, %v25
    %v28 = vld [vmem:[%s2] sm:$0xf]
    %v29 = vld [vmem:[%s2 + $0x4] sm:$0xf]
    %v30 = vld [vmem:[%s2 + $0x8] sm:$0xf]
    %v31 = vld [vmem:[%s2 + $0xc] sm:$0xf]
    %v32 = vld [vmem:[%s2 + $0x10] sm:$0xf]
    %v33 = vld [vmem:[%s2 + $0x14] sm:$0xf]
    %v34 = vld [vmem:[%s2 + $0x18] sm:$0xf]
    %v35 = vld [vmem:[%s2 + $0x1c] sm:$0xf]
    %v36 = vld [vmem:[%s2 + $0x20] sm:$0xf]
    %v37 = vld [vmem:[%s2 + $0x24] sm:$0xf]
    %v38 = vld [vmem:[%s2 + $0x28] sm:$0xf]
    %v39 = vld [vmem:[%s2 + $0x2c] sm:$0xf]
    %v40 = vld [vmem:[%s2 + $0x30] sm:$0xf]
    %v41 = vld [vmem:[%s2 + $0x34] sm:$0xf]
    %v42 = vld [vmem:[%s2 + $0x38] sm:$0xf]
    %v43 = vld [vmem:[%s2 + $0x3c] sm:$0xf]
    %v44 = vld [vmem:[%s2 + $0x40] sm:$0xf]
    %v45 = vld [vmem:[%s2 + $0x44] sm:$0xf]
    %v46 = vld [vmem:[%s2 + $0x48] sm:$0xf]
    %v47 = vld [vmem:[%s2 + $0x4c] sm:$0xf]
    %v48 = vld [vmem:[%s2 + $0x50] sm:$0xf]
    %v49 = vld [vmem:[%s2 + $0x54] sm:$0xf]
    %v50 = vld [vmem:[%s2 + $0x58] sm:$0xf]
    %v51 = vld [vmem:[%s2 + $0x5c] sm:$0xf]
    %v52 = vld [vmem:[%s2 + $0x60] sm:$0xf]
    %v53 = vld [vmem:[%s2 + $0x64] sm:$0xf]
    %v54 = vld [vmem:[%s2 + $0x68] sm:$0xf]
    %v55 = vld [vmem:[%s2 + $0x6c] sm:$0xf]
    %v56 = vld [vmem:[%s2 + $0x70] sm:$0xf]
    %v57 = vld [vmem:[%s2 + $0x74] sm:$0xf]
    %v58 = vld [vmem:[%s2 + $0x78] sm:$0xf]
    %v59 = vld [vmem:[%s2 + $0x7c] sm:$0xf]
    %v60 = vld [vmem:[%s3] sm:$0x1]
    %v62 = vlaneseq
    %v63 = vshrl.u32 %v62, 7
    %v64 = vsub.s32 0, %v63
    %v65 = vrot.slane %v60, %v64
    %v99 = vunpack.c.l.b16 %v28
    %v100 = vunpack.c.l.b16 %v29
    %v101 = vunpack.c.l.b16 %v30
    %v102 = vunpack.c.l.b16 %v31
    %v103 = vunpack.c.l.b16 %v32
    %v104 = vunpack.c.l.b16 %v33
    %v105 = vunpack.c.l.b16 %v34
    %v106 = vunpack.c.l.b16 %v35
    %v107 = vunpack.c.l.b16 %v36
    %v108 = vunpack.c.l.b16 %v37
    %v109 = vunpack.c.l.b16 %v38
    %v110 = vunpack.c.l.b16 %v39
    %v111 = vunpack.c.l.b16 %v40
    %v112 = vunpack.c.l.b16 %v41
    %v113 = vunpack.c.l.b16 %v42
    %v114 = vunpack.c.l.b16 %v43
    %v115 = vunpack.c.l.b16 %v44
    %v116 = vunpack.c.l.b16 %v45
    %v117 = vunpack.c.l.b16 %v46
    %v118 = vunpack.c.l.b16 %v47
    %v119 = vunpack.c.l.b16 %v48
    %v120 = vunpack.c.l.b16 %v49
    %v121 = vunpack.c.l.b16 %v50
    %v122 = vunpack.c.l.b16 %v51
    %v123 = vunpack.c.l.b16 %v52
    %v124 = vunpack.c.l.b16 %v53
    %v125 = vunpack.c.l.b16 %v54
    %v126 = vunpack.c.l.b16 %v55
    %v127 = vunpack.c.l.b16 %v56
    %v128 = vunpack.c.l.b16 %v57
    %v129 = vunpack.c.l.b16 %v58
    %v130 = vunpack.c.l.b16 %v59
    %v131 = vpack.c.b16 %v100, %v99
    %v132 = vpack.c.b16 %v102, %v101
    %v133 = vpack.c.b16 %v104, %v103
    %v134 = vpack.c.b16 %v106, %v105
    %v135 = vpack.c.b16 %v108, %v107
    %v136 = vpack.c.b16 %v110, %v109
    %v137 = vpack.c.b16 %v112, %v111
    %v138 = vpack.c.b16 %v114, %v113
    %v139 = vpack.c.b16 %v116, %v115
    %v140 = vpack.c.b16 %v118, %v117
    %v141 = vpack.c.b16 %v120, %v119
    %v142 = vpack.c.b16 %v122, %v121
    %v143 = vpack.c.b16 %v124, %v123
    %v144 = vpack.c.b16 %v126, %v125
    %v145 = vpack.c.b16 %v128, %v127
    %v146 = vpack.c.b16 %v130, %v129
    %163 = vmatprep.subr.bf16.mxu0 0
    %164 = vmatpush1.bf16.msra.mxu0 %v138
    %165 = vmatprep.subr.bf16.mxu0 0
    %166 = vmatpush1.bf16.msra.mxu0 %v137
    %167 = vmatprep.subr.bf16.mxu0 0
    %168 = vmatpush1.bf16.msra.mxu0 %v136
    %169 = vmatprep.subr.bf16.mxu0 0
    %170 = vmatpush1.bf16.msra.mxu0 %v135
    %171 = vmatprep.subr.bf16.mxu0 0
    %172 = vmatpush1.bf16.msra.mxu0 %v134
    %173 = vmatprep.subr.bf16.mxu0 0
    %174 = vmatpush1.bf16.msra.mxu0 %v133
    %175 = vmatprep.subr.bf16.mxu0 0
    %176 = vmatpush1.bf16.msra.mxu0 %v132
    %177 = vmatprep.subr.bf16.mxu0 0
    %178 = vmatpush1.bf16.msra.mxu0 %v131
    %179 = vmatprep.subr.bf16.mxu0 0
    %180 = vmatpush2.bf16.msra.mxu0 %v146
    %181 = vmatprep.subr.bf16.mxu0 0
    %182 = vmatpush2.bf16.msra.mxu0 %v145
    %183 = vmatprep.subr.bf16.mxu0 0
    %184 = vmatpush2.bf16.msra.mxu0 %v144
    %185 = vmatprep.subr.bf16.mxu0 0
    %186 = vmatpush2.bf16.msra.mxu0 %v143
    %187 = vmatprep.subr.bf16.mxu0 0
    %188 = vmatpush2.bf16.msra.mxu0 %v142
    %189 = vmatprep.subr.bf16.mxu0 0
    %190 = vmatpush2.bf16.msra.mxu0 %v141
    %191 = vmatprep.subr.bf16.mxu0 0
    %192 = vmatpush2.bf16.msra.mxu0 %v140
    %193 = vmatprep.subr.bf16.mxu0 0
    %194 = vmatpush2.bf16.msra.mxu0 %v139
    %195 = vmatprep.mubr.bf16.mxu0 %v27
    %196 = vmatmul.mubr.bf16.gmra.mxu0 %v26
    %v197 = vpop.f32.mrf.mxu0
    %v198 = vadd.f32 %v65, %v197
    %v199 = vpop.f32.mrf.mxu0
    %v200 = vpop.f32.mrf.mxu0
    %v201 = vpop.f32.mrf.mxu0
    %202 = vdwg.mxu0
    %v203 = vmax.f32 %v198, 0.0
    %v204 = vlaneseq
    %v205 = vshrl.u32 %v204, 7
    %s206 = smul.u32 0, 8
    %v207 = vstv %s206
    %v208 = vadd.s32 %v207, %v205
    %v209 = vmul.u32 %v208, 2654435761
    %s210 = sld [smem:[#allocation3]]
    %s211 = smul.u32 %s210, 374761393
    %v212 = vstv %s211
    %v213 = vadd.s32 %v209, %v212
    %v214 = vshrl.u32 %v213, 16
    %v215 = vxor.u32 %v213, %v214
    %v216 = vmul.u32 %v215, 2246822519
    %v217 = vshrl.u32 %v216, 13
    %v218 = vxor.u32 %v216, %v217
    %v219 = vmul.u32 %v218, 3266489917
    %v220 = vshrl.u32 %v219, 16
    %v221 = vxor.u32 %v219, %v220
    %v222 = vlaneseq
    %v223 = vand.u32 %v222, 127
    %v224 = vshrl.u32 %v221, %v223
    %v225 = vand.u32 %v224, 1
    %vm226 = vcmp.eq.s32.totalorder %v225, 1
    %v227 = vmul.f32 %v203, 2.0
    %v228 = vsel %vm226, %v227, 0.0
    %v229 = vld [vmem:[%s4] sm:$0xff]
    %v230 = vld [vmem:[%s4 + $0x8] sm:$0xff]
    %v231 = vld [vmem:[%s4 + $0x10] sm:$0xff]
    %v232 = vld [vmem:[%s4 + $0x18] sm:$0xff]
    %v233 = vld [vmem:[%s5] sm:$0x1]
    %v235 = vlaneseq
    %v236 = vshrl.u32 %v235, 7
    %v237 = vsub.s32 0, %v236
    %v238 = vrot.slane %v233, %v237
    %vm240 = vcmask 261120
    %v242 = vsel %vm240, %v228, 0
    %244 = vmatprep.subr.mxu0 0.0
    %245 = vmatpush1.msra.mxu0 0.0
    %246 = vmatprep.subr.mxu0 0.0
    %247 = vmatpush1.msra.mxu0 0.0
    %248 = vmatprep.subr.mxu0 0.0
    %249 = vmatpush1.msra.mxu0 0.0
    %250 = vmatprep.subr.mxu0 0.0
    %251 = vmatpush1.msra.mxu0 0.0
    %252 = vmatprep.subr.mxu0 0.0
    %253 = vmatpush1.msra.mxu0 0.0
    %254 = vmatprep.subr.mxu0 0.0
    %255 = vmatpush1.msra.mxu0 0.0
    %256 = vmatprep.subr.mxu0 0.0
    %257 = vmatpush1.msra.mxu0 0.0
    %258 = vmatprep.subr.mxu0 0.0
    %259 = vmatpush1.msra.mxu0 0.0
    %260 = vmatprep.subr.mxu0 0.0
    %261 = vmatpush1.msra.mxu0 0.0
    %262 = vmatprep.subr.mxu0 0.0
    %263 = vmatpush1.msra.mxu0 0.0
    %264 = vmatprep.subr.mxu0 0.0
    %265 = vmatpush1.msra.mxu0 0.0
    %266 = vmatprep.subr.mxu0 0.0
    %267 = vmatpush1.msra.mxu0 0.0
    %268 = vmatprep.subr.mxu0 0.0
    %269 = vmatpush1.msra.mxu0 %v232
    %270 = vmatprep.subr.mxu0 0.0
    %271 = vmatpush1.msra.mxu0 %v231
    %272 = vmatprep.subr.mxu0 0.0
    %273 = vmatpush1.msra.mxu0 %v230
    %274 = vmatprep.subr.mxu0 0.0
    %275 = vmatpush1.msra.mxu0 %v229
    %276 = vmatprep.subr.mxu0 0.0
    %277 = vmatpush2.msra.mxu0 0.0
    %278 = vmatprep.subr.mxu0 0.0
    %279 = vmatpush2.msra.mxu0 0.0
    %280 = vmatprep.subr.mxu0 0.0
    %281 = vmatpush2.msra.mxu0 0.0
    %282 = vmatprep.subr.mxu0 0.0
    %283 = vmatpush2.msra.mxu0 0.0
    %284 = vmatprep.subr.mxu0 0.0
    %285 = vmatpush2.msra.mxu0 0.0
    %286 = vmatprep.subr.mxu0 0.0
    %287 = vmatpush2.msra.mxu0 0.0
    %288 = vmatprep.subr.mxu0 0.0
    %289 = vmatpush2.msra.mxu0 0.0
    %290 = vmatprep.subr.mxu0 0.0
    %291 = vmatpush2.msra.mxu0 0.0
    %292 = vmatprep.subr.mxu0 0.0
    %293 = vmatpush2.msra.mxu0 0.0
    %294 = vmatprep.subr.mxu0 0.0
    %295 = vmatpush2.msra.mxu0 0.0
    %296 = vmatprep.subr.mxu0 0.0
    %297 = vmatpush2.msra.mxu0 0.0
    %298 = vmatprep.subr.mxu0 0.0
    %299 = vmatpush2.msra.mxu0 0.0
    %300 = vmatprep.subr.mxu0 0.0
    %301 = vmatpush2.msra.mxu0 0.0
    %302 = vmatprep.subr.mxu0 0.0
    %303 = vmatpush2.msra.mxu0 0.0
    %304 = vmatprep.subr.mxu0 0.0
    %305 = vmatpush2.msra.mxu0 0.0
    %306 = vmatprep.subr.mxu0 0.0
    %307 = vmatpush2.msra.mxu0 0.0
    %308 = vmatprep.mubr.f32.mxu0 0.0
    %309 = vmatmul.mubr.f32.gmra.mxu0 %v242
    %v310 = vpop.f32.mrf.mxu0
    %v311 = vadd.f32 %v238, %v310
    %v312 = vpop.f32.mrf.mxu0
    %313 = vdwg.mxu0
    %314 = vxpose.xlu0.b32.start [1/16] %v311, 128
    %315 = vxpose.xlu0.b32.cont [2/16] 0.0, 128
    %316 = vxpose.xlu0.b32.cont [3/16] 0.0, 128
    %317 = vxpose.xlu0.b32.cont [4/16] 0.0, 128
    %318 = vxpose.xlu0.b32.cont [5/16] 0.0, 128
    %319 = vxpose.xlu0.b32.cont [6/16] 0.0, 128
    %320 = vxpose.xlu0.b32.cont [7/16] 0.0, 128
    %321 = vxpose.xlu0.b32.cont [8/16] 0.0, 128
    %322 = vxpose.xlu0.b32.cont [9/16] 0.0, 128
    %323 = vxpose.xlu0.b32.cont [10/16] 0.0, 128
    %324 = vxpose.xlu0.b32.cont [11/16] 0.0, 128
    %325 = vxpose.xlu0.b32.cont [12/16] 0.0, 128
    %326 = vxpose.xlu0.b32.cont [13/16] 0.0, 128
    %327 = vxpose.xlu0.b32.cont [14/16] 0.0, 128
    %328 = vxpose.xlu0.b32.cont [15/16] 0.0, 128
    %329 = vxpose.xlu0.b32.end [16/16] 0.0, 128
    %v330 = vpop.trf.xlu0
    %v331 = vpop.trf.xlu0
    %v332 = vpop.trf.xlu0
    %v333 = vpop.trf.xlu0
    %v334 = vpop.trf.xlu0
    %v335 = vpop.trf.xlu0
    %v336 = vpop.trf.xlu0
    %v337 = vpop.trf.xlu0
    %v338 = vpop.trf.xlu0
    %v339 = vpop.trf.xlu0
    %v340 = vpop.trf.xlu0
    %v341 = vpop.trf.xlu0
    %v342 = vpop.trf.xlu0
    %v343 = vpop.trf.xlu0
    %v344 = vpop.trf.xlu0
    %v345 = vpop.trf.xlu0
    %vm346 = vcmask 58368
    %347 = vst.msk [vmem:[#allocation4] sm:$0x3] %vm346, %v330
    // Predicated region
    $region22: #{tpu_custom_call.1} parent=1 // pred_check
      _
    $region23: #{tpu_custom_call.1} parent=1 // pred_check_branch
      %349 = sbr.rel (0) target = $region25
    $region24: #{tpu_custom_call.1} parent=1 // pred_region
      %s351 = ssub.s32 32, 32
      %352 = vsyncadd [#allocation5], %s351
      %s354 = sshll.u32 [#allocation4], 4
      %s355 = int_to_ptr.vmem [resolvable:$true] %s354
      %357 = dma.vmem_to_hbm [thread:$0]  %s355, 32, %s6, [#allocation5]
    $region25: #{tpu_custom_call.1} parent=1 // pred_fallthru
      _
    // Predicated region
    $region26: #{tpu_custom_call.1} parent=1 // pred_check
      _
    $region27: #{tpu_custom_call.1} parent=1 // pred_check_branch
      %359 = sbr.rel (0) target = $region29
    $region28: #{tpu_custom_call.1} parent=1 // pred_region
      %360 = dma.done [#allocation5], 32
    $region29: #{tpu_custom_call.1} parent=1 // pred_fallthru
      _
    %361 = vsyncpa [#allocation5], 1

</llo_original>
